<compile_context>
chip_gen: v7x
topology: tpu7x:2x2x1
jax: 0.10.0
libtpu: 0.0.40
codegen_flags: <defaults>
</compile_context>

<pallas_src>
import math

import jax
import jax.numpy as jnp
from jax.experimental import pallas as pl
from jax.experimental.pallas import tpu as pltpu  # noqa: F401  (TPU backend import)


# ----------------------------- Pallas kernel ------------------------------ #
def _timestep_embed_kernel(ts_ref, const_ref, o_ref):
    """Fused: one-hot gather of pe rows -> Linear -> SiLU -> Linear -> [B, D]."""
    B, D = o_ref.shape
    max_len = const_ref.shape[0] - 2 * D - 2

    # Static slices into the single packed constant buffer.
    pe = const_ref[pl.ds(0, max_len), :]                # [L, D]
    w1 = const_ref[pl.ds(max_len, D), :]                # [D, D]
    w2 = const_ref[pl.ds(max_len + D, D), :]            # [D, D]
    b1 = const_ref[pl.ds(max_len + 2 * D, 1), :]        # [1, D]
    b2 = const_ref[pl.ds(max_len + 2 * D + 1, 1), :]    # [1, D]

    # One-hot gather on the MXU: x[b, :] = pe[timesteps[b], :].
    ts = ts_ref[...]                                            # [B, 1] int32
    col = jax.lax.broadcasted_iota(jnp.int32, (B, max_len), 1)  # [B, L]
    onehot = (col == ts).astype(jnp.float32)                    # [B, L]
    x = jnp.dot(onehot, pe, preferred_element_type=jnp.float32)  # [B, D]

    # MLP: Linear -> SiLU -> Linear (f32 VPU/EUP path; works on v5e/v6e/v7x).
    h = jnp.dot(x, w1, preferred_element_type=jnp.float32) + b1
    h = h * jax.nn.sigmoid(h)
    y = jnp.dot(h, w2, preferred_element_type=jnp.float32) + b2

    o_ref[...] = y.astype(o_ref.dtype)


def timestep_embedder_forward(timesteps, packed_const):
    """timesteps: [B] int, packed_const: [max_len + 2D + 2, D] f32 -> [1, B, D]."""
    n_rows, D = packed_const.shape
    B = timesteps.shape[0]
    ts2d = timesteps.reshape(B, 1).astype(jnp.int32)

    full = lambda shape: pl.BlockSpec(shape, lambda: (0,) * len(shape))
    out2d = pl.pallas_call(
        _timestep_embed_kernel,
        out_shape=jax.ShapeDtypeStruct((B, D), jnp.float32),
        grid=(),
        in_specs=[
            full((B, 1)),        # timesteps (tiny int32 VMEM block)
            full((n_rows, D)),   # packed pe | W1 | W2 | b1 | b2 (single DMA)
        ],
        out_specs=full((B, D)),
    )(ts2d, packed_const)

    # permute(1, 0, 2) of a [B, 1, D] tensor == [1, B, D]: free metadata relabel.
    return out2d[None]


# ------------------------------ Module glue ------------------------------- #
def make_sinusoidal_pe(max_len, d_model):
    """Standard PositionalEncoding.pe buffer, shape [max_len, 1, d_model]."""
    position = jnp.arange(max_len, dtype=jnp.float32)[:, None]            # [L, 1]
    div_term = jnp.exp(
        jnp.arange(0, d_model, 2, dtype=jnp.float32)
        * (-math.log(10000.0) / d_model)
    )                                                                      # [D/2]
    pe = jnp.zeros((max_len, d_model), dtype=jnp.float32)
    pe = pe.at[:, 0::2].set(jnp.sin(position * div_term))
    pe = pe.at[:, 1::2].set(jnp.cos(position * div_term))
    return pe[:, None, :]                                                  # [L, 1, D]


def init_params(key, latent_dim):
    """Deterministic init matching nn.Linear shapes; weights stored as [in, out]."""
    k1, k2, k3, k4 = jax.random.split(key, 4)
    bound = 1.0 / math.sqrt(latent_dim)
    w1 = jax.random.uniform(k1, (latent_dim, latent_dim), jnp.float32, -bound, bound)
    b1 = jax.random.uniform(k2, (latent_dim,), jnp.float32, -bound, bound)
    w2 = jax.random.uniform(k3, (latent_dim, latent_dim), jnp.float32, -bound, bound)
    b2 = jax.random.uniform(k4, (latent_dim,), jnp.float32, -bound, bound)
    return w1, b1, w2, b2


def pack_constants(pe, params):
    """Build the single packed constant buffer: [pe | W1 | W2 | b1 | b2]."""
    w1, b1, w2, b2 = params
    max_len, _, D = pe.shape
    pe_flat = pe.reshape(max_len, D)
    return jnp.concatenate(
        [pe_flat, w1, w2, b1[None, :], b2[None, :]], axis=0
    )  # [max_len + 2D + 2, D]


# ------------------------------- Reference -------------------------------- #
def reference_forward(timesteps, pe, params):
    w1, b1, w2, b2 = params
    x = pe[timesteps]                                    # [B, 1, D]
    h = x @ w1 + b1
    h = h * jax.nn.sigmoid(h)
    y = h @ w2 + b2
    return jnp.transpose(y, (1, 0, 2))                   # [1, B, D]


if __name__ == "__main__":
    latent_dim = 32
    max_len = 64
    batch = 2

    key = jax.random.PRNGKey(0)
    k_param, k_t = jax.random.split(key)

    params = init_params(k_param, latent_dim)
    pe = make_sinusoidal_pe(max_len, latent_dim)
    packed_const = pack_constants(pe, params)
    timesteps = jax.random.randint(k_t, (batch,), 0, max_len, dtype=jnp.int32)

    out = jax.block_until_ready(timestep_embedder_forward(timesteps, packed_const))
    ref = reference_forward(timesteps, pe, params)

    assert out.shape == (1, batch, latent_dim), out.shape
    assert jnp.allclose(out, ref, atol=1e-5, rtol=1e-5), "mismatch vs reference"

    print("KERNEL_OK")
</pallas_src>

<mosaic_0001>
module attributes {stable_mosaic.version = 11 : i64} {
  func.func @_timestep_embed_kernel(%arg0: memref<2x1xi32, #tpu.memory_space<vmem>>, %arg1: memref<130x32xf32, #tpu.memory_space<vmem>>, %arg2: memref<2x32xf32, #tpu.memory_space<vmem>>) attributes {dimension_semantics = [], scalar_prefetch = 0 : i64, scratch_operands = 0 : i64, tpu.core_type = #tpu.core_type<tc>} {
    %c0 = arith.constant 0 : index
    %c0_0 = arith.constant 0 : index
    %0 = vector.load %arg1[%c0, %c0_0] : memref<130x32xf32, #tpu.memory_space<vmem>>, vector<64x32xf32>
    %c64 = arith.constant 64 : index
    %c0_1 = arith.constant 0 : index
    %1 = vector.load %arg1[%c64, %c0_1] : memref<130x32xf32, #tpu.memory_space<vmem>>, vector<32x32xf32>
    %c96 = arith.constant 96 : index
    %c0_2 = arith.constant 0 : index
    %2 = vector.load %arg1[%c96, %c0_2] : memref<130x32xf32, #tpu.memory_space<vmem>>, vector<32x32xf32>
    %c128 = arith.constant 128 : index
    %c0_3 = arith.constant 0 : index
    %3 = vector.load %arg1[%c128, %c0_3] : memref<130x32xf32, #tpu.memory_space<vmem>>, vector<1x32xf32>
    %c129 = arith.constant 129 : index
    %c0_4 = arith.constant 0 : index
    %4 = vector.load %arg1[%c129, %c0_4] : memref<130x32xf32, #tpu.memory_space<vmem>>, vector<1x32xf32>
    %c0_5 = arith.constant 0 : index
    %c0_6 = arith.constant 0 : index
    %5 = vector.load %arg0[%c0_5, %c0_6] : memref<2x1xi32, #tpu.memory_space<vmem>>, vector<2x1xi32>
    %6 = tpu.iota {dimensions = array<i32: 1>} : vector<2x64xi32>
    %7 = vector.broadcast %5 : vector<2x1xi32> to vector<2x64xi32>
    %8 = arith.cmpi eq, %6, %7 : vector<2x64xi32>
    %9 = arith.extui %8 : vector<2x64xi1> to vector<2x64xi32>
    %10 = arith.sitofp %9 : vector<2x64xi32> to vector<2x64xf32>
    %cst = arith.constant dense<0.000000e+00> : vector<2x32xf32>
    %11 = tpu.matmul %10, %0, %cst {dimension_numbers = #tpu.dot_dimension_numbers<[1], [0], [0], [1], [0, 0, 1, 1], [], []>} : vector<2x64xf32>, vector<64x32xf32>, vector<2x32xf32> -> vector<2x32xf32>
    %cst_7 = arith.constant dense<0.000000e+00> : vector<2x32xf32>
    %12 = tpu.matmul %11, %1, %cst_7 {dimension_numbers = #tpu.dot_dimension_numbers<[1], [0], [0], [1], [0, 0, 1, 1], [], []>} : vector<2x32xf32>, vector<32x32xf32>, vector<2x32xf32> -> vector<2x32xf32>
    %13 = vector.broadcast %3 : vector<1x32xf32> to vector<2x32xf32>
    %14 = arith.addf %12, %13 : vector<2x32xf32>
    %15 = arith.negf %14 : vector<2x32xf32>
    %16 = math.exp %15 : vector<2x32xf32>
    %cst_8 = arith.constant 1.000000e+00 : f32
    %17 = vector.broadcast %cst_8 : f32 to vector<2x32xf32>
    %18 = arith.addf %17, %16 : vector<2x32xf32>
    %19 = arith.divf %17, %18 : vector<2x32xf32>
    %20 = arith.mulf %14, %19 : vector<2x32xf32>
    %cst_9 = arith.constant dense<0.000000e+00> : vector<2x32xf32>
    %21 = tpu.matmul %20, %2, %cst_9 {dimension_numbers = #tpu.dot_dimension_numbers<[1], [0], [0], [1], [0, 0, 1, 1], [], []>} : vector<2x32xf32>, vector<32x32xf32>, vector<2x32xf32> -> vector<2x32xf32>
    %22 = vector.broadcast %4 : vector<1x32xf32> to vector<2x32xf32>
    %23 = arith.addf %21, %22 : vector<2x32xf32>
    %c0_10 = arith.constant 0 : index
    %c0_11 = arith.constant 0 : index
    %24 = vector.load %arg2[%c0_10, %c0_11] : memref<2x32xf32, #tpu.memory_space<vmem>>, vector<2x32xf32>
    tpu.vector_store %arg2[%c0_10, %c0_11], %23 {strides = array<i32>} : memref<2x32xf32, #tpu.memory_space<vmem>>, vector<2x32xf32>,
    return
  }
}

</mosaic_0001>

<llo_original>
// kernel: tpu_custom_call.1
$region0: #{tpu_custom_call.1}
  #allocation0 [shape = 'u32[]', space=smem, size = 0x4, offset = 0x4, fixed_abs, tag = 'smem constant byte address 0x4 - core index']
  #allocation1 [shape = 'u32[144,128]{1,0:T(1,128)}', space=vmem, size = 0x12000, scoped, tag = 'internal scratch']
  %s0 = inlined_call_operand.vmem [shape: s32[2,1], index: 0, kind: input, shape index: {}]
  %s1 = inlined_call_operand.vmem [shape: f32[130,32], index: 1, kind: input, shape index: {}]
  %s2 = inlined_call_operand.hbm [shape: f32[2,32], index: 2, kind: output, shape index: {}]
  %s3 = sld [smem:[#allocation0]]
  $region18: #{tpu_custom_call.1} parent=0
    _
  %s5 = ssub.s32 1, %s3
  %s6 = scalar_select 0, %s5, %s3
  $region1: #{tpu_custom_call.1} parent=0
    #allocation2 [shape = 'u8[1024]{0}', space=vmem, size = 0x400, scoped, tag = 'output window, operand 0, single buffered']
    #allocation3 [shape = 's32[1]{0}', space=sflag, size = 0x4, scoped, tag = 'scoped memory for tpu_custom_call.1']
    %7 = vsyncpa [#allocation3], 0
    // Predicated region
    $region2: #{tpu_custom_call.1} parent=1 // pred_check
      _
    $region3: #{tpu_custom_call.1} parent=1 // pred_check_branch
      %9 = sbr.rel (0) target = $region5
    $region4: #{tpu_custom_call.1} parent=1 // pred_region
      _
    $region5: #{tpu_custom_call.1} parent=1 // pred_fallthru
      _
    // Predicated region
    $region6: #{tpu_custom_call.1} parent=1 // pred_check
      _
    $region7: #{tpu_custom_call.1} parent=1 // pred_check_branch
      %11 = sbr.rel (0) target = $region9
    $region8: #{tpu_custom_call.1} parent=1 // pred_region
      _
    $region9: #{tpu_custom_call.1} parent=1 // pred_fallthru
      _
    %v12 = vld [vmem:[%s1] sm:$0xff]
    %v13 = vld [vmem:[%s1 + $0x8] sm:$0xff]
    %v14 = vld [vmem:[%s1 + $0x10] sm:$0xff]
    %v15 = vld [vmem:[%s1 + $0x18] sm:$0xff]
    %v16 = vld [vmem:[%s1 + $0x20] sm:$0xff]
    %v17 = vld [vmem:[%s1 + $0x28] sm:$0xff]
    %v18 = vld [vmem:[%s1 + $0x30] sm:$0xff]
    %v19 = vld [vmem:[%s1 + $0x38] sm:$0xff]
    %v20 = vld [vmem:[%s1 + $0x40] sm:$0xff]
    %v21 = vld [vmem:[%s1 + $0x48] sm:$0xff]
    %v22 = vld [vmem:[%s1 + $0x50] sm:$0xff]
    %v23 = vld [vmem:[%s1 + $0x58] sm:$0xff]
    %v24 = vld [vmem:[%s1 + $0x60] sm:$0xff]
    %v25 = vld [vmem:[%s1 + $0x68] sm:$0xff]
    %v26 = vld [vmem:[%s1 + $0x70] sm:$0xff]
    %v27 = vld [vmem:[%s1 + $0x78] sm:$0xff]
    %v28 = vld [vmem:[%s1 + $0x80] sm:$0x1]
    %v29 = vld [vmem:[%s1 + $0x81] sm:$0x1]
    %v30 = vld [vmem:[%s0] sm:$0x3]
    %v31 = vlaneseq
    %v32 = vand.u32 %v31, 127
    %33 = vset.pattern.permute.xlu0 0
    %34 = vperm.xlu0 %33, %v30
    %v35 = vpop.permute.xlu0 %34
    %vm36 = vcmp.eq.s32.totalorder %v32, %v35
    %v37 = vsel %vm36, 1, 0
    %v38 = vcvt.s32.f32 %v37
    %vm39 = vcmask 523264
    %v41 = vsel %vm39, %v38, 0
    %43 = vmatprep.subr.mxu0 0.0
    %44 = vmatpush1.msra.mxu0 %v12
    %45 = vmatprep.subr.mxu0 0.0
    %46 = vmatpush1.msra.mxu0 %v13
    %47 = vmatprep.subr.mxu0 0.0
    %48 = vmatpush1.msra.mxu0 %v14
    %49 = vmatprep.subr.mxu0 0.0
    %50 = vmatpush1.msra.mxu0 %v15
    %51 = vmatprep.subr.mxu0 0.0
    %52 = vmatpush1.msra.mxu0 %v16
    %53 = vmatprep.subr.mxu0 0.0
    %54 = vmatpush1.msra.mxu0 %v17
    %55 = vmatprep.subr.mxu0 0.0
    %56 = vmatpush1.msra.mxu0 %v18
    %57 = vmatprep.subr.mxu0 0.0
    %58 = vmatpush1.msra.mxu0 %v19
    %59 = vmatprep.subr.mxu0 0.0
    %60 = vmatpush1.msra.mxu0 0.0
    %61 = vmatprep.subr.mxu0 0.0
    %62 = vmatpush1.msra.mxu0 0.0
    %63 = vmatprep.subr.mxu0 0.0
    %64 = vmatpush1.msra.mxu0 0.0
    %65 = vmatprep.subr.mxu0 0.0
    %66 = vmatpush1.msra.mxu0 0.0
    %67 = vmatprep.subr.mxu0 0.0
    %68 = vmatpush1.msra.mxu0 0.0
    %69 = vmatprep.subr.mxu0 0.0
    %70 = vmatpush1.msra.mxu0 0.0
    %71 = vmatprep.subr.mxu0 0.0
    %72 = vmatpush1.msra.mxu0 0.0
    %73 = vmatprep.subr.mxu0 0.0
    %74 = vmatpush1.msra.mxu0 0.0
    %75 = vmatprep.subr.mxu0 0.0
    %76 = vmatpush1.msra.mxu0 0.0
    %77 = vmatprep.subr.mxu0 0.0
    %78 = vmatpush1.msra.mxu0 0.0
    %79 = vmatprep.subr.mxu0 0.0
    %80 = vmatpush1.msra.mxu0 0.0
    %81 = vmatprep.subr.mxu0 0.0
    %82 = vmatpush1.msra.mxu0 0.0
    %83 = vmatprep.subr.mxu0 0.0
    %84 = vmatpush1.msra.mxu0 0.0
    %85 = vmatprep.subr.mxu0 0.0
    %86 = vmatpush1.msra.mxu0 0.0
    %87 = vmatprep.subr.mxu0 0.0
    %88 = vmatpush1.msra.mxu0 0.0
    %89 = vmatprep.subr.mxu0 0.0
    %90 = vmatpush1.msra.mxu0 0.0
    %91 = vmatprep.subr.mxu0 0.0
    %92 = vmatpush1.msra.mxu0 0.0
    %93 = vmatprep.subr.mxu0 0.0
    %94 = vmatpush1.msra.mxu0 0.0
    %95 = vmatprep.subr.mxu0 0.0
    %96 = vmatpush1.msra.mxu0 0.0
    %97 = vmatprep.subr.mxu0 0.0
    %98 = vmatpush1.msra.mxu0 0.0
    %99 = vmatprep.subr.mxu0 0.0
    %100 = vmatpush1.msra.mxu0 0.0
    %101 = vmatprep.subr.mxu0 0.0
    %102 = vmatpush1.msra.mxu0 0.0
    %103 = vmatprep.subr.mxu0 0.0
    %104 = vmatpush1.msra.mxu0 0.0
    %105 = vmatprep.subr.mxu0 0.0
    %106 = vmatpush1.msra.mxu0 0.0
    %107 = vmatprep.mubr.f32.mxu0 0.0
    %108 = vmatmul.mubr.f32.gmra.mrb[0].mxu0 %v41
    %v109 = vpop.f32.mrb[0].mxu0
    %v110 = vadd.f32 0.0, %v109
    %v111 = vpop.f32.mrb[0].mxu0
    %112 = vdwg.mxu0
    %v113 = vlaneseq
    %v114 = vshrl.u32 %v113, 7
    %v115 = vsub.s32 0, %v114
    %v116 = vrot.slane %v28, %v115
    %vm117 = vcmask 261120
    %v119 = vsel %vm117, %v110, 0
    %121 = vmatprep.subr.mxu0 0.0
    %122 = vmatpush1.msra.mxu0 %v20
    %123 = vmatprep.subr.mxu0 0.0
    %124 = vmatpush1.msra.mxu0 %v21
    %125 = vmatprep.subr.mxu0 0.0
    %126 = vmatpush1.msra.mxu0 %v22
    %127 = vmatprep.subr.mxu0 0.0
    %128 = vmatpush1.msra.mxu0 %v23
    %129 = vmatprep.subr.mxu0 0.0
    %130 = vmatpush1.msra.mxu0 0.0
    %131 = vmatprep.subr.mxu0 0.0
    %132 = vmatpush1.msra.mxu0 0.0
    %133 = vmatprep.subr.mxu0 0.0
    %134 = vmatpush1.msra.mxu0 0.0
    %135 = vmatprep.subr.mxu0 0.0
    %136 = vmatpush1.msra.mxu0 0.0
    %137 = vmatprep.subr.mxu0 0.0
    %138 = vmatpush1.msra.mxu0 0.0
    %139 = vmatprep.subr.mxu0 0.0
    %140 = vmatpush1.msra.mxu0 0.0
    %141 = vmatprep.subr.mxu0 0.0
    %142 = vmatpush1.msra.mxu0 0.0
    %143 = vmatprep.subr.mxu0 0.0
    %144 = vmatpush1.msra.mxu0 0.0
    %145 = vmatprep.subr.mxu0 0.0
    %146 = vmatpush1.msra.mxu0 0.0
    %147 = vmatprep.subr.mxu0 0.0
    %148 = vmatpush1.msra.mxu0 0.0
    %149 = vmatprep.subr.mxu0 0.0
    %150 = vmatpush1.msra.mxu0 0.0
    %151 = vmatprep.subr.mxu0 0.0
    %152 = vmatpush1.msra.mxu0 0.0
    %153 = vmatprep.subr.mxu0 0.0
    %154 = vmatpush1.msra.mxu0 0.0
    %155 = vmatprep.subr.mxu0 0.0
    %156 = vmatpush1.msra.mxu0 0.0
    %157 = vmatprep.subr.mxu0 0.0
    %158 = vmatpush1.msra.mxu0 0.0
    %159 = vmatprep.subr.mxu0 0.0
    %160 = vmatpush1.msra.mxu0 0.0
    %161 = vmatprep.subr.mxu0 0.0
    %162 = vmatpush1.msra.mxu0 0.0
    %163 = vmatprep.subr.mxu0 0.0
    %164 = vmatpush1.msra.mxu0 0.0
    %165 = vmatprep.subr.mxu0 0.0
    %166 = vmatpush1.msra.mxu0 0.0
    %167 = vmatprep.subr.mxu0 0.0
    %168 = vmatpush1.msra.mxu0 0.0
    %169 = vmatprep.subr.mxu0 0.0
    %170 = vmatpush1.msra.mxu0 0.0
    %171 = vmatprep.subr.mxu0 0.0
    %172 = vmatpush1.msra.mxu0 0.0
    %173 = vmatprep.subr.mxu0 0.0
    %174 = vmatpush1.msra.mxu0 0.0
    %175 = vmatprep.subr.mxu0 0.0
    %176 = vmatpush1.msra.mxu0 0.0
    %177 = vmatprep.subr.mxu0 0.0
    %178 = vmatpush1.msra.mxu0 0.0
    %179 = vmatprep.subr.mxu0 0.0
    %180 = vmatpush1.msra.mxu0 0.0
    %181 = vmatprep.subr.mxu0 0.0
    %182 = vmatpush1.msra.mxu0 0.0
    %183 = vmatprep.subr.mxu0 0.0
    %184 = vmatpush1.msra.mxu0 0.0
    %185 = vmatprep.mubr.f32.mxu0 0.0
    %186 = vmatmul.mubr.f32.gmra.mrb[0].mxu0 %v119
    %v187 = vpop.f32.mrb[0].mxu0
    %v188 = vadd.f32 %v116, %v187
    %v189 = vpop.f32.mrb[0].mxu0
    %190 = vdwg.mxu0
    %v191 = vxor.u32 %v188, 2147483648
    %v192 = vmul.f32 %v191, 1.442695
    %v193 = vpow.pop %v192
    %v194 = vadd.f32 %v193, 1.0
    %v195 = vrcp.pop %v194
    %v196 = vmul.f32 1.0, %v195
    %v197 = vmul.f32 %v188, %v196
    %v198 = vlaneseq
    %v199 = vshrl.u32 %v198, 7
    %v200 = vsub.s32 0, %v199
    %v201 = vrot.slane %v29, %v200
    %v203 = vsel %vm117, %v197, 0
    %205 = vmatprep.subr.mxu0 0.0
    %206 = vmatpush1.msra.mxu0 %v24
    %207 = vmatprep.subr.mxu0 0.0
    %208 = vmatpush1.msra.mxu0 %v25
    %209 = vmatprep.subr.mxu0 0.0
    %210 = vmatpush1.msra.mxu0 %v26
    %211 = vmatprep.subr.mxu0 0.0
    %212 = vmatpush1.msra.mxu0 %v27
    %213 = vmatprep.subr.mxu0 0.0
    %214 = vmatpush1.msra.mxu0 0.0
    %215 = vmatprep.subr.mxu0 0.0
    %216 = vmatpush1.msra.mxu0 0.0
    %217 = vmatprep.subr.mxu0 0.0
    %218 = vmatpush1.msra.mxu0 0.0
    %219 = vmatprep.subr.mxu0 0.0
    %220 = vmatpush1.msra.mxu0 0.0
    %221 = vmatprep.subr.mxu0 0.0
    %222 = vmatpush1.msra.mxu0 0.0
    %223 = vmatprep.subr.mxu0 0.0
    %224 = vmatpush1.msra.mxu0 0.0
    %225 = vmatprep.subr.mxu0 0.0
    %226 = vmatpush1.msra.mxu0 0.0
    %227 = vmatprep.subr.mxu0 0.0
    %228 = vmatpush1.msra.mxu0 0.0
    %229 = vmatprep.subr.mxu0 0.0
    %230 = vmatpush1.msra.mxu0 0.0
    %231 = vmatprep.subr.mxu0 0.0
    %232 = vmatpush1.msra.mxu0 0.0
    %233 = vmatprep.subr.mxu0 0.0
    %234 = vmatpush1.msra.mxu0 0.0
    %235 = vmatprep.subr.mxu0 0.0
    %236 = vmatpush1.msra.mxu0 0.0
    %237 = vmatprep.subr.mxu0 0.0
    %238 = vmatpush1.msra.mxu0 0.0
    %239 = vmatprep.subr.mxu0 0.0
    %240 = vmatpush1.msra.mxu0 0.0
    %241 = vmatprep.subr.mxu0 0.0
    %242 = vmatpush1.msra.mxu0 0.0
    %243 = vmatprep.subr.mxu0 0.0
    %244 = vmatpush1.msra.mxu0 0.0
    %245 = vmatprep.subr.mxu0 0.0
    %246 = vmatpush1.msra.mxu0 0.0
    %247 = vmatprep.subr.mxu0 0.0
    %248 = vmatpush1.msra.mxu0 0.0
    %249 = vmatprep.subr.mxu0 0.0
    %250 = vmatpush1.msra.mxu0 0.0
    %251 = vmatprep.subr.mxu0 0.0
    %252 = vmatpush1.msra.mxu0 0.0
    %253 = vmatprep.subr.mxu0 0.0
    %254 = vmatpush1.msra.mxu0 0.0
    %255 = vmatprep.subr.mxu0 0.0
    %256 = vmatpush1.msra.mxu0 0.0
    %257 = vmatprep.subr.mxu0 0.0
    %258 = vmatpush1.msra.mxu0 0.0
    %259 = vmatprep.subr.mxu0 0.0
    %260 = vmatpush1.msra.mxu0 0.0
    %261 = vmatprep.subr.mxu0 0.0
    %262 = vmatpush1.msra.mxu0 0.0
    %263 = vmatprep.subr.mxu0 0.0
    %264 = vmatpush1.msra.mxu0 0.0
    %265 = vmatprep.subr.mxu0 0.0
    %266 = vmatpush1.msra.mxu0 0.0
    %267 = vmatprep.subr.mxu0 0.0
    %268 = vmatpush1.msra.mxu0 0.0
    %269 = vmatprep.mubr.f32.mxu0 0.0
    %270 = vmatmul.mubr.f32.gmra.mrb[0].mxu0 %v203
    %v271 = vpop.f32.mrb[0].mxu0
    %v272 = vadd.f32 %v201, %v271
    %v273 = vpop.f32.mrb[0].mxu0
    %274 = vdwg.mxu0
    %vm275 = vcmask 254976
    %276 = vst.msk [vmem:[#allocation2] sm:$0x3] %vm275, %v272
    // Predicated region
    $region10: #{tpu_custom_call.1} parent=1 // pred_check
      _
    $region11: #{tpu_custom_call.1} parent=1 // pred_check_branch
      %278 = sbr.rel (0) target = $region13
    $region12: #{tpu_custom_call.1} parent=1 // pred_region
      %s280 = ssub.s32 32, 32
      %281 = vsyncadd [#allocation3], %s280
      %s283 = sshll.u32 [#allocation2], 4
      %s284 = int_to_ptr.vmem [resolvable:$true] %s283
      %286 = dma.vmem_to_hbm [thread:$0]  %s284, 32, %s2, [#allocation3]
    $region13: #{tpu_custom_call.1} parent=1 // pred_fallthru
      _
    // Predicated region
    $region14: #{tpu_custom_call.1} parent=1 // pred_check
      _
    $region15: #{tpu_custom_call.1} parent=1 // pred_check_branch
      %288 = sbr.rel (0) target = $region17
    $region16: #{tpu_custom_call.1} parent=1 // pred_region
      %289 = dma.done [#allocation3], 32
    $region17: #{tpu_custom_call.1} parent=1 // pred_fallthru
      _
    %290 = vsyncpa [#allocation3], 1

</llo_original>
